<compile_context>
chip_gen: v7x
topology: tpu7x:2x2x1
jax: 0.10.0
libtpu: 0.0.40
codegen_flags: <defaults>
</compile_context>

<pallas_src>
import functools

import jax
import jax.numpy as jnp
from jax.experimental import pallas as pl
from jax.experimental.pallas import tpu as pltpu

LANES = 128
SUBLANES = 8
# ~2 MiB per input tile per grid step (double-buffered inputs -> ~8 MiB VMEM).
TILE_BYTES = 2 * 1024 * 1024


def _round_up(x, m):
    return (x + m - 1) // m * m


def _sub_rows(dtype):
    """Full-vreg sublane chunk height for a dtype: 8 f32 / 16 bf16 / 32 int8."""
    itemsize = jnp.dtype(dtype).itemsize
    return SUBLANES * max(1, 4 // itemsize)


# ---------------------------------------------------------------------------
# Kernel: per-(batch, class) sums of logits*targets, logits, targets.
# ---------------------------------------------------------------------------
def _class_sums_kernel(p_ref, t_ref, spt_ref, sp_ref, st_ref, *,
                       chunks, crows, block_h, valid_h, ragged, unroll):
    """Grid = (N, C, grid_h).  Each step folds a (block_h, W) tile of one
    (n, c) slice into resident (crows, W) f32 partial-sum accumulators.  The
    hot loop is pure vld + VALU; the cross-lane reduction happens once,
    outside the kernel, on the tiny partials."""

    @pl.when(pl.program_id(2) == 0)
    def _():
        spt_ref[...] = jnp.zeros_like(spt_ref)
        sp_ref[...] = jnp.zeros_like(sp_ref)
        st_ref[...] = jnp.zeros_like(st_ref)

    w = p_ref.shape[-1]
    if ragged:
        # Rows >= `valid` in this tile are Pallas partial-block padding
        # (unspecified values): select them to exactly zero.  For non-tail
        # tiles valid >= block_h, so the mask is all-true there.
        valid = valid_h - pl.program_id(2) * block_h
        base = jax.lax.broadcasted_iota(jnp.int32, (crows, w), 0)  # hoisted

    def body(k, carry):
        a_pt, a_p, a_t = carry
        lo = pl.multiple_of(k * crows, crows)
        p = p_ref[pl.ds(lo, crows), :].astype(jnp.float32)
        t = t_ref[pl.ds(lo, crows), :].astype(jnp.float32)
        if ragged:
            m = (base + lo) < valid
            p = jnp.where(m, p, 0.0)
            t = jnp.where(m, t, 0.0)
        return (a_pt + p * t, a_p + p, a_t + t)

    zero = jnp.zeros((crows, w), jnp.float32)
    a_pt, a_p, a_t = jax.lax.fori_loop(
        0, chunks, body, (zero, zero, zero), unroll=unroll)

    spt_ref[...] += a_pt
    sp_ref[...] += a_p
    st_ref[...] += a_t


def _per_class_sums(logits, targets):
    """Per-class sums of logits*targets, logits, targets over (N, H, W).

    Consumes the arrays in their native NCHW layout (no pad / reshape copies)
    and returns three (C,) float32 vectors.
    """
    assert logits.shape == targets.shape
    n, c, h, w = logits.shape

    sub = max(_sub_rows(logits.dtype), _sub_rows(targets.dtype))
    w_pad = _round_up(w, LANES)                       # VMEM lane footprint
    itemsize = max(jnp.dtype(logits.dtype).itemsize,
                   jnp.dtype(targets.dtype).itemsize)

    if h <= sub:
        # Tiny spatial height: one full-extent (h, W) block, single chunk.
        block_h = h
        crows = h
    else:
        # Largest sublane-aligned tile height within the per-input budget,
        # never exceeding the array extent (tail handled by in-kernel mask).
        budget_h = max(sub, TILE_BYTES // (w_pad * itemsize) // sub * sub)
        block_h = min(budget_h, h // sub * sub)
        crows = sub
    grid_h = pl.cdiv(h, block_h)
    ragged = (h % block_h) != 0
    chunks = block_h // crows

    # Unroll the sublane fold enough to hide loop overhead without blowing
    # vreg pressure (one f32 chunk = (crows/8)*(w_pad/128) vregs per input,
    # plus 3 resident accumulators of the same size).
    vregs_per_chunk = max(1, crows // SUBLANES) * (w_pad // LANES)
    unroll = max(1, min(8, 16 // vregs_per_chunk, chunks))

    kernel = functools.partial(
        _class_sums_kernel, chunks=chunks, crows=crows, block_h=block_h,
        valid_h=h, ragged=ragged, unroll=unroll)

    part = jax.ShapeDtypeStruct((n, c, crows, w), jnp.float32)
    in_spec = pl.BlockSpec((None, None, block_h, w),
                           lambda ni, ci, hi: (ni, ci, hi, 0))
    out_spec = pl.BlockSpec((None, None, crows, w),
                            lambda ni, ci, hi: (ni, ci, 0, 0))

    spt, sp, st = pl.pallas_call(
        kernel,
        out_shape=(part, part, part),
        grid_spec=pltpu.PrefetchScalarGridSpec(
            num_scalar_prefetch=0,
            grid=(n, c, grid_h),
            in_specs=[in_spec, in_spec],
            out_specs=[out_spec, out_spec, out_spec],
        ),
        compiler_params=pltpu.CompilerParams(
            # (n, c) are independent (megacore-shardable on v7x); the h axis
            # carries the resident accumulators -> arbitrary, innermost.
            dimension_semantics=("parallel", "parallel", "arbitrary"),
        ),
    )(logits, targets)

    def finish(parts):
        return jnp.sum(parts, axis=(0, 2, 3))          # (C,), tiny epilogue

    return finish(spt), finish(sp), finish(st)


# ---------------------------------------------------------------------------
# Forward pass.
# ---------------------------------------------------------------------------
def weight_dice_loss_map(logits, targets, weight_map):
    """Pallas TPU equivalent of WeightDiceLoss_map()(logits, targets, map)."""
    assert logits.shape == targets.shape
    num_classes = logits.shape[1]
    assert num_classes == 2, "WeightDiceLoss_map hard-codes 2 classes"

    cls_pt, cls_p, cls_t = _per_class_sums(logits, targets)

    # Class weights (the module's two hard-coded `for i in range(2)` loops).
    w = (jnp.sum(cls_t) + 1.0) / (cls_t + 1.0)
    w = w / jnp.sum(w)

    # dice_sum(map) = sum_c w_c * (2*map*S_pt_c + 1) / (union_c + 1) = a*map + b
    inv_union = 1.0 / (cls_p + cls_t + 1.0)
    a = jnp.sum(2.0 * w * cls_pt * inv_union)
    b = jnp.sum(w * inv_union)

    # out = 1 - dice_sum/C = (-a/C)*map + (1 - b/C).  Left to XLA's fused
    # elementwise emitter (single read+write at HBM roofline) per perf review.
    scale = -a / num_classes
    offset = 1.0 - b / num_classes
    # TODO(synk): the reference forward also print()s dice_sum; debug printing omitted.
    return scale * weight_map.astype(jnp.float32) + offset


# ---------------------------------------------------------------------------
# Pure-JAX reference mirroring the PyTorch module.
# ---------------------------------------------------------------------------
def weight_dice_loss_map_ref(logits, targets, weight_map):
    class_num = logits.shape[1]
    num_sum = jnp.sum(targets, axis=(0, 2, 3))
    w = (jnp.sum(num_sum) + 1.0) / (num_sum + 1.0)
    w = w / jnp.sum(w)
    dice_sum = 0.0
    for i in range(2):
        inter = weight_map * jnp.sum(logits[:, i] * targets[:, i])
        union = jnp.sum(logits[:, i]) + jnp.sum(targets[:, i])
        dice_sum = dice_sum + w[i] * (2.0 * inter + 1.0) / (union + 1.0)
    return 1.0 - dice_sum / class_num


if __name__ == "__main__":
    key = jax.random.PRNGKey(0)
    k1, k2, k3 = jax.random.split(key, 3)

    fn = jax.jit(weight_dice_loss_map)

    # Case 1: the nominal small shape.
    n_batch, num_classes, height, width = 2, 2, 16, 16
    logits = jax.random.uniform(
        k1, (n_batch, num_classes, height, width), dtype=jnp.float32)
    targets = (jax.random.uniform(
        k2, (n_batch, num_classes, height, width)) > 0.5).astype(jnp.float32)
    weight_map = jax.random.uniform(
        k3, (n_batch, height, width), dtype=jnp.float32)
    out = jax.block_until_ready(fn(logits, targets, weight_map))
    ref = weight_dice_loss_map_ref(logits, targets, weight_map)
    assert out.shape == ref.shape, (out.shape, ref.shape)
    assert jnp.allclose(out, ref, atol=1e-5, rtol=1e-5), (out, ref)

    # Case 2: ragged spatial size (exercises the in-kernel tail masking that
    # replaced the whole-array jnp.pad copies).
    h2, w2 = 21, 19
    logits2 = jax.random.uniform(
        k1, (n_batch, num_classes, h2, w2), dtype=jnp.float32)
    targets2 = (jax.random.uniform(
        k2, (n_batch, num_classes, h2, w2)) > 0.5).astype(jnp.float32)
    weight_map2 = jax.random.uniform(k3, (n_batch, h2, w2), dtype=jnp.float32)
    out2 = jax.block_until_ready(fn(logits2, targets2, weight_map2))
    ref2 = weight_dice_loss_map_ref(logits2, targets2, weight_map2)
    assert out2.shape == ref2.shape, (out2.shape, ref2.shape)
    assert jnp.allclose(out2, ref2, atol=1e-5, rtol=1e-5), (out2, ref2)

    print("KERNEL_OK")
</pallas_src>

<mosaic_0001>
module attributes {stable_mosaic.version = 11 : i64} {
  func.func @_class_sums_kernel(%arg0: i32, %arg1: i32, %arg2: i32, %arg3: memref<1x1x16x16xf32, #tpu.memory_space<vmem>>, %arg4: memref<1x1x16x16xf32, #tpu.memory_space<vmem>>, %arg5: memref<1x1x8x16xf32, #tpu.memory_space<vmem>>, %arg6: memref<1x1x8x16xf32, #tpu.memory_space<vmem>>, %arg7: memref<1x1x8x16xf32, #tpu.memory_space<vmem>>) attributes {dimension_semantics = [#tpu.dimension_semantics<parallel>, #tpu.dimension_semantics<parallel>, #tpu.dimension_semantics<arbitrary>], iteration_bounds = array<i64: 2, 2, 1>, scalar_prefetch = 0 : i64, scratch_operands = 0 : i64, tpu.core_type = #tpu.core_type<tc>, window_params = [{transform_indices = @transform_0, window_bounds = array<i64: 1, 1, 16, 16>}, {transform_indices = @transform_1, window_bounds = array<i64: 1, 1, 16, 16>}, {transform_indices = @transform_2, window_bounds = array<i64: 1, 1, 8, 16>}, {transform_indices = @transform_3, window_bounds = array<i64: 1, 1, 8, 16>}, {transform_indices = @transform_4, window_bounds = array<i64: 1, 1, 8, 16>}]} {
    %c0_i32 = arith.constant 0 : i32
    %0 = arith.cmpi eq, %arg2, %c0_i32 : i32
    %1 = arith.extui %0 : i1 to i32
    %c0_i32_0 = arith.constant 0 : i32
    %2 = arith.cmpi ne, %1, %c0_i32_0 : i32
    scf.if %2 {
      %cst_38 = arith.constant 0.000000e+00 : f32
      %46 = vector.broadcast %cst_38 : f32 to vector<8x16xf32>
      %c0_39 = arith.constant 0 : index
      %c0_40 = arith.constant 0 : index
      %c0_41 = arith.constant 0 : index
      %c0_42 = arith.constant 0 : index
      %47 = vector.load %arg5[%c0_39, %c0_40, %c0_41, %c0_42] : memref<1x1x8x16xf32, #tpu.memory_space<vmem>>, vector<1x1x8x16xf32>
      %48 = vector.shape_cast %47 : vector<1x1x8x16xf32> to vector<8x16xf32>
      %49 = vector.shape_cast %46 : vector<8x16xf32> to vector<1x1x8x16xf32>
      tpu.vector_store %arg5[%c0_39, %c0_40, %c0_41, %c0_42], %49 {strides = array<i32>} : memref<1x1x8x16xf32, #tpu.memory_space<vmem>>, vector<1x1x8x16xf32>,
      %cst_43 = arith.constant 0.000000e+00 : f32
      %50 = vector.broadcast %cst_43 : f32 to vector<8x16xf32>
      %c0_44 = arith.constant 0 : index
      %c0_45 = arith.constant 0 : index
      %c0_46 = arith.constant 0 : index
      %c0_47 = arith.constant 0 : index
      %51 = vector.load %arg6[%c0_44, %c0_45, %c0_46, %c0_47] : memref<1x1x8x16xf32, #tpu.memory_space<vmem>>, vector<1x1x8x16xf32>
      %52 = vector.shape_cast %51 : vector<1x1x8x16xf32> to vector<8x16xf32>
      %53 = vector.shape_cast %50 : vector<8x16xf32> to vector<1x1x8x16xf32>
      tpu.vector_store %arg6[%c0_44, %c0_45, %c0_46, %c0_47], %53 {strides = array<i32>} : memref<1x1x8x16xf32, #tpu.memory_space<vmem>>, vector<1x1x8x16xf32>,
      %cst_48 = arith.constant 0.000000e+00 : f32
      %54 = vector.broadcast %cst_48 : f32 to vector<8x16xf32>
      %c0_49 = arith.constant 0 : index
      %c0_50 = arith.constant 0 : index
      %c0_51 = arith.constant 0 : index
      %c0_52 = arith.constant 0 : index
      %55 = vector.load %arg7[%c0_49, %c0_50, %c0_51, %c0_52] : memref<1x1x8x16xf32, #tpu.memory_space<vmem>>, vector<1x1x8x16xf32>
      %56 = vector.shape_cast %55 : vector<1x1x8x16xf32> to vector<8x16xf32>
      %57 = vector.shape_cast %54 : vector<8x16xf32> to vector<1x1x8x16xf32>
      tpu.vector_store %arg7[%c0_49, %c0_50, %c0_51, %c0_52], %57 {strides = array<i32>} : memref<1x1x8x16xf32, #tpu.memory_space<vmem>>, vector<1x1x8x16xf32>,
    } else {
    }
    %cst = arith.constant 0.000000e+00 : f32
    %3 = vector.broadcast %cst : f32 to vector<8x16xf32>
    %c0_i32_1 = arith.constant 0 : i32
    %c8_i32 = arith.constant 8 : i32
    %4 = arith.muli %c0_i32_1, %c8_i32 : i32
    %5 = tpu.assume_multiple %4, 8 : i32
    %c0 = arith.constant 0 : index
    %c0_2 = arith.constant 0 : index
    %6 = arith.index_cast %5 : i32 to index
    %c0_3 = arith.constant 0 : index
    %7 = vector.load %arg3[%c0, %c0_2, %6, %c0_3] : memref<1x1x16x16xf32, #tpu.memory_space<vmem>>, vector<1x1x8x16xf32>
    %8 = vector.shape_cast %7 : vector<1x1x8x16xf32> to vector<8x16xf32>
    %c0_4 = arith.constant 0 : index
    %c0_5 = arith.constant 0 : index
    %9 = arith.index_cast %5 : i32 to index
    %c0_6 = arith.constant 0 : index
    %10 = vector.load %arg4[%c0_4, %c0_5, %9, %c0_6] : memref<1x1x16x16xf32, #tpu.memory_space<vmem>>, vector<1x1x8x16xf32>
    %11 = vector.shape_cast %10 : vector<1x1x8x16xf32> to vector<8x16xf32>
    %12 = arith.mulf %8, %11 : vector<8x16xf32>
    %13 = arith.addf %3, %12 : vector<8x16xf32>
    %14 = arith.addf %3, %8 : vector<8x16xf32>
    %15 = arith.addf %3, %11 : vector<8x16xf32>
    %c1_i32 = arith.constant 1 : i32
    %c8_i32_7 = arith.constant 8 : i32
    %16 = arith.muli %c1_i32, %c8_i32_7 : i32
    %17 = tpu.assume_multiple %16, 8 : i32
    %c0_8 = arith.constant 0 : index
    %c0_9 = arith.constant 0 : index
    %18 = arith.index_cast %17 : i32 to index
    %c0_10 = arith.constant 0 : index
    %19 = vector.load %arg3[%c0_8, %c0_9, %18, %c0_10] : memref<1x1x16x16xf32, #tpu.memory_space<vmem>>, vector<1x1x8x16xf32>
    %20 = vector.shape_cast %19 : vector<1x1x8x16xf32> to vector<8x16xf32>
    %c0_11 = arith.constant 0 : index
    %c0_12 = arith.constant 0 : index
    %21 = arith.index_cast %17 : i32 to index
    %c0_13 = arith.constant 0 : index
    %22 = vector.load %arg4[%c0_11, %c0_12, %21, %c0_13] : memref<1x1x16x16xf32, #tpu.memory_space<vmem>>, vector<1x1x8x16xf32>
    %23 = vector.shape_cast %22 : vector<1x1x8x16xf32> to vector<8x16xf32>
    %24 = arith.mulf %20, %23 : vector<8x16xf32>
    %25 = arith.addf %13, %24 : vector<8x16xf32>
    %26 = arith.addf %14, %20 : vector<8x16xf32>
    %27 = arith.addf %15, %23 : vector<8x16xf32>
    %c2_i32 = arith.constant 2 : i32
    %c0_14 = arith.constant 0 : index
    %c0_15 = arith.constant 0 : index
    %c0_16 = arith.constant 0 : index
    %c0_17 = arith.constant 0 : index
    %28 = vector.load %arg5[%c0_14, %c0_15, %c0_16, %c0_17] : memref<1x1x8x16xf32, #tpu.memory_space<vmem>>, vector<1x1x8x16xf32>
    %29 = vector.shape_cast %28 : vector<1x1x8x16xf32> to vector<8x16xf32>
    %30 = arith.addf %29, %25 : vector<8x16xf32>
    %c0_18 = arith.constant 0 : index
    %c0_19 = arith.constant 0 : index
    %c0_20 = arith.constant 0 : index
    %c0_21 = arith.constant 0 : index
    %31 = vector.load %arg5[%c0_18, %c0_19, %c0_20, %c0_21] : memref<1x1x8x16xf32, #tpu.memory_space<vmem>>, vector<1x1x8x16xf32>
    %32 = vector.shape_cast %31 : vector<1x1x8x16xf32> to vector<8x16xf32>
    %33 = vector.shape_cast %30 : vector<8x16xf32> to vector<1x1x8x16xf32>
    tpu.vector_store %arg5[%c0_18, %c0_19, %c0_20, %c0_21], %33 {strides = array<i32>} : memref<1x1x8x16xf32, #tpu.memory_space<vmem>>, vector<1x1x8x16xf32>,
    %c0_22 = arith.constant 0 : index
    %c0_23 = arith.constant 0 : index
    %c0_24 = arith.constant 0 : index
    %c0_25 = arith.constant 0 : index
    %34 = vector.load %arg6[%c0_22, %c0_23, %c0_24, %c0_25] : memref<1x1x8x16xf32, #tpu.memory_space<vmem>>, vector<1x1x8x16xf32>
    %35 = vector.shape_cast %34 : vector<1x1x8x16xf32> to vector<8x16xf32>
    %36 = arith.addf %35, %26 : vector<8x16xf32>
    %c0_26 = arith.constant 0 : index
    %c0_27 = arith.constant 0 : index
    %c0_28 = arith.constant 0 : index
    %c0_29 = arith.constant 0 : index
    %37 = vector.load %arg6[%c0_26, %c0_27, %c0_28, %c0_29] : memref<1x1x8x16xf32, #tpu.memory_space<vmem>>, vector<1x1x8x16xf32>
    %38 = vector.shape_cast %37 : vector<1x1x8x16xf32> to vector<8x16xf32>
    %39 = vector.shape_cast %36 : vector<8x16xf32> to vector<1x1x8x16xf32>
    tpu.vector_store %arg6[%c0_26, %c0_27, %c0_28, %c0_29], %39 {strides = array<i32>} : memref<1x1x8x16xf32, #tpu.memory_space<vmem>>, vector<1x1x8x16xf32>,
    %c0_30 = arith.constant 0 : index
    %c0_31 = arith.constant 0 : index
    %c0_32 = arith.constant 0 : index
    %c0_33 = arith.constant 0 : index
    %40 = vector.load %arg7[%c0_30, %c0_31, %c0_32, %c0_33] : memref<1x1x8x16xf32, #tpu.memory_space<vmem>>, vector<1x1x8x16xf32>
    %41 = vector.shape_cast %40 : vector<1x1x8x16xf32> to vector<8x16xf32>
    %42 = arith.addf %41, %27 : vector<8x16xf32>
    %c0_34 = arith.constant 0 : index
    %c0_35 = arith.constant 0 : index
    %c0_36 = arith.constant 0 : index
    %c0_37 = arith.constant 0 : index
    %43 = vector.load %arg7[%c0_34, %c0_35, %c0_36, %c0_37] : memref<1x1x8x16xf32, #tpu.memory_space<vmem>>, vector<1x1x8x16xf32>
    %44 = vector.shape_cast %43 : vector<1x1x8x16xf32> to vector<8x16xf32>
    %45 = vector.shape_cast %42 : vector<8x16xf32> to vector<1x1x8x16xf32>
    tpu.vector_store %arg7[%c0_34, %c0_35, %c0_36, %c0_37], %45 {strides = array<i32>} : memref<1x1x8x16xf32, #tpu.memory_space<vmem>>, vector<1x1x8x16xf32>,
    return
  }
  func.func @transform_0(%arg0: i32, %arg1: i32, %arg2: i32) -> (i32, i32, i32, i32) {
    %c0_i32 = arith.constant 0 : i32
    %c0_i32_0 = arith.constant 0 : i32
    return %arg0, %arg1, %arg2, %c0_i32 : i32, i32, i32, i32
  }
  func.func @transform_1(%arg0: i32, %arg1: i32, %arg2: i32) -> (i32, i32, i32, i32) {
    %c0_i32 = arith.constant 0 : i32
    %c0_i32_0 = arith.constant 0 : i32
    return %arg0, %arg1, %arg2, %c0_i32 : i32, i32, i32, i32
  }
  func.func @transform_2(%arg0: i32, %arg1: i32, %arg2: i32) -> (i32, i32, i32, i32) {
    %c0_i32 = arith.constant 0 : i32
    %c0_i32_0 = arith.constant 0 : i32
    %c0_i32_1 = arith.constant 0 : i32
    return %arg0, %arg1, %c0_i32, %c0_i32_0 : i32, i32, i32, i32
  }
  func.func @transform_3(%arg0: i32, %arg1: i32, %arg2: i32) -> (i32, i32, i32, i32) {
    %c0_i32 = arith.constant 0 : i32
    %c0_i32_0 = arith.constant 0 : i32
    %c0_i32_1 = arith.constant 0 : i32
    return %arg0, %arg1, %c0_i32, %c0_i32_0 : i32, i32, i32, i32
  }
  func.func @transform_4(%arg0: i32, %arg1: i32, %arg2: i32) -> (i32, i32, i32, i32) {
    %c0_i32 = arith.constant 0 : i32
    %c0_i32_0 = arith.constant 0 : i32
    %c0_i32_1 = arith.constant 0 : i32
    return %arg0, %arg1, %c0_i32, %c0_i32_0 : i32, i32, i32, i32
  }
}

</mosaic_0001>

<llo_original>
// kernel: weight_dice_loss_map.1
$region0: #{weight_dice_loss_map.1}
  #allocation0 [shape = 'u32[]', space=smem, size = 0x4, offset = 0x4, fixed_abs, tag = 'smem constant byte address 0x4 - core index']
  #allocation1 [shape = 'u32[144,128]{1,0:T(1,128)}', space=vmem, size = 0x12000, scoped, tag = 'internal scratch']
  %s0 = inlined_call_operand.hbm [shape: f32[2,2,16,16], index: 0, kind: input, shape index: {}]
  %s1 = inlined_call_operand.hbm [shape: f32[2,2,16,16], index: 1, kind: input, shape index: {}]
  %s2 = inlined_call_operand.vmem [shape: f32[2,2,8,16], index: 2, kind: output, shape index: {0}]
  %s3 = inlined_call_operand.vmem [shape: f32[2,2,8,16], index: 3, kind: output, shape index: {1}]
  %s4 = inlined_call_operand.vmem [shape: f32[2,2,8,16], index: 4, kind: output, shape index: {2}]
  %5 = xla_tuple %s2, %s3, %s4
  %s6 = sld [smem:[#allocation0]]
  $region69: #{weight_dice_loss_map.1} parent=0
    _
  %s8 = ssub.s32 1, %s6
  %s9 = scalar_select 0, %s8, %s6
  $region1: #{weight_dice_loss_map.1} parent=0
    #allocation2 [shape = 'u8[16384]{0}', space=vmem, size = 0x4000, scoped, tag = 'input window, operand 0']
    #allocation3 [shape = 's32[2]{0}', space=sflag, size = 0x8, scoped, tag = 'scoped memory for weight_dice_loss_map.1']
    #allocation4 [shape = 'u8[16384]{0}', space=vmem, size = 0x4000, scoped, tag = 'input window, operand 1']
    #allocation5 [shape = 's32[2]{0}', space=sflag, size = 0x8, scoped, tag = 'scoped memory for weight_dice_loss_map.1']
    %10 = vsyncpa [#allocation3], 0
    %s11 = scalar_lea.sflag [#allocation3], 1
    %12 = vsyncpa %s11, 0
    %13 = vsyncpa [#allocation5], 0
    %s14 = scalar_lea.sflag [#allocation5], 1
    %15 = vsyncpa %s14, 0
    loop: start=0, step=1, limit=6
    $region2: #{weight_dice_loss_map.1} parent=1 // loop_pre_header
      _
    $region3: #{weight_dice_loss_map.1} parent=1 // loop_header
      %s17 = sphi 0, %s21
      %p18 = scmp.ge.s32.totalorder %s17, 6
      %s24 = sphi 0, %s43
      %s25 = sphi 0, %s39
      %s26 = sphi 0, %s35
      %s27 = sphi 0, %s24
      %s28 = sphi 0, %s25
      %s29 = sphi 0, %s26
      %s30 = sphi 0, %s27
      %s31 = sphi 0, %s28
      %s32 = sphi 0, %s29
      %s50 = sphi 0, %s52
      %s53 = sphi 0, %s50
      %s54 = sphi 0, %s53
      %s70 = sphi 0, %s54
      %s80 = sphi 0, %s82
      %s83 = sphi 0, %s80
      %s84 = sphi 0, %s83
      %s100 = sphi 0, %s84
      %s108 = sphi 0, %s110
      %s111 = sphi 0, %s108
      %s112 = sphi 0, %s111
      %s128 = sphi 0, %s112
      %s136 = sphi 0, %s138
      %s139 = sphi 0, %s136
      %s140 = sphi 0, %s139
      %s156 = sphi 0, %s140
      %s164 = sphi 0, %s166
      %s167 = sphi 0, %s164
      %s168 = sphi 0, %s167
      %s184 = sphi 0, %s168
    $region4: #{weight_dice_loss_map.1} parent=1 // loop_header_branch
      %20 = sbr.rel (%p18) target = $region8
    $region5: #{weight_dice_loss_map.1} parent=1 // loop_body
      %s22 = ssub.s32 %s17, 1
      %s23 = ssub.s32 %s17, 2
      %s33 = sadd.s32 1, %s26
      %p34 = scmp.ge.s32.totalorder %s33, 1
      %s35 = scalar_select %p34, 0, %s33
      %s36 = sadd.s32 1, %s25
      %s37 = scalar_select %p34, %s36, %s25
      %p38 = scmp.ge.s32.totalorder %s37, 2
      %s39 = scalar_select %p38, 0, %s37
      %s40 = sadd.s32 1, %s24
      %s41 = scalar_select %p38, %s40, %s24
      %p42 = scmp.ge.s32.totalorder %s41, 2
      %s43 = scalar_select %p42, 0, %s41
      %s44 = ssub.s32 %s24, %s43
      %s45 = ssub.s32 %s25, %s39
      %s46 = sor.u32 %s44, %s45
      %s47 = ssub.s32 %s26, %s35
      %s48 = sor.u32 %s46, %s47
      %p49 = scmp.eq.s32.totalorder %s48, 0
      %s51 = sadd.s32 %s50, 1
      %s52 = scalar_select %p49, %s50, %s51
      %p55 = pneg %p49
      %p56 = scmp.eq.s32.totalorder %s17, 3
      %p57 = por %p55, %p56
      %p58 = scmp.ne.s32.totalorder %s50, %s53
      %p59 = scmp.eq.s32.totalorder %s17, 0
      %p60 = por %p58, %p59
      %p61 = scmp.ne.s32.totalorder %s50, %s53
      %p62 = scmp.eq.s32.totalorder %s22, 3
      %p63 = por %p61, %p62
      %p64 = scmp.ne.s32.totalorder %s53, %s54
      %p65 = scmp.eq.s32.totalorder %s22, 0
      %p66 = por %p64, %p65
      %p67 = scmp.ne.s32.totalorder %s53, %s54
      %p68 = scmp.eq.s32.totalorder %s23, 3
      %p69 = por %p67, %p68
      %p71 = scmp.ne.s32.totalorder %s54, %s70
      %p72 = scmp.eq.s32.totalorder %s23, 0
      %p73 = por %p71, %p72
      %s74 = ssub.s32 %s24, %s43
      %s75 = ssub.s32 %s25, %s39
      %s76 = sor.u32 %s74, %s75
      %s77 = ssub.s32 %s26, %s35
      %s78 = sor.u32 %s76, %s77
      %p79 = scmp.eq.s32.totalorder %s78, 0
      %s81 = sadd.s32 %s80, 1
      %s82 = scalar_select %p79, %s80, %s81
      %p85 = pneg %p79
      %p86 = scmp.eq.s32.totalorder %s17, 3
      %p87 = por %p85, %p86
      %p88 = scmp.ne.s32.totalorder %s80, %s83
      %p89 = scmp.eq.s32.totalorder %s17, 0
      %p90 = por %p88, %p89
      %p91 = scmp.ne.s32.totalorder %s80, %s83
      %p92 = scmp.eq.s32.totalorder %s22, 3
      %p93 = por %p91, %p92
      %p94 = scmp.ne.s32.totalorder %s83, %s84
      %p95 = scmp.eq.s32.totalorder %s22, 0
      %p96 = por %p94, %p95
      %p97 = scmp.ne.s32.totalorder %s83, %s84
      %p98 = scmp.eq.s32.totalorder %s23, 3
      %p99 = por %p97, %p98
      %p101 = scmp.ne.s32.totalorder %s84, %s100
      %p102 = scmp.eq.s32.totalorder %s23, 0
      %p103 = por %p101, %p102
      %s104 = ssub.s32 %s24, %s43
      %s105 = ssub.s32 %s25, %s39
      %s106 = sor.u32 %s104, %s105
      %p107 = scmp.eq.s32.totalorder %s106, 0
      %s109 = sadd.s32 %s108, 1
      %s110 = scalar_select %p107, %s108, %s109
      %p113 = pneg %p107
      %p114 = scmp.eq.s32.totalorder %s17, 3
      %p115 = por %p113, %p114
      %p116 = scmp.ne.s32.totalorder %s108, %s111
      %p117 = scmp.eq.s32.totalorder %s17, 0
      %p118 = por %p116, %p117
      %p119 = scmp.ne.s32.totalorder %s108, %s111
      %p120 = scmp.eq.s32.totalorder %s22, 3
      %p121 = por %p119, %p120
      %p122 = scmp.ne.s32.totalorder %s111, %s112
      %p123 = scmp.eq.s32.totalorder %s22, 0
      %p124 = por %p122, %p123
      %p125 = scmp.ne.s32.totalorder %s111, %s112
      %p126 = scmp.eq.s32.totalorder %s23, 3
      %p127 = por %p125, %p126
      %p129 = scmp.ne.s32.totalorder %s112, %s128
      %p130 = scmp.eq.s32.totalorder %s23, 0
      %p131 = por %p129, %p130
      %s132 = ssub.s32 %s24, %s43
      %s133 = ssub.s32 %s25, %s39
      %s134 = sor.u32 %s132, %s133
      %p135 = scmp.eq.s32.totalorder %s134, 0
      %s137 = sadd.s32 %s136, 1
      %s138 = scalar_select %p135, %s136, %s137
      %p141 = pneg %p135
      %p142 = scmp.eq.s32.totalorder %s17, 3
      %p143 = por %p141, %p142
      %p144 = scmp.ne.s32.totalorder %s136, %s139
      %p145 = scmp.eq.s32.totalorder %s17, 0
      %p146 = por %p144, %p145
      %p147 = scmp.ne.s32.totalorder %s136, %s139
      %p148 = scmp.eq.s32.totalorder %s22, 3
      %p149 = por %p147, %p148
      %p150 = scmp.ne.s32.totalorder %s139, %s140
      %p151 = scmp.eq.s32.totalorder %s22, 0
      %p152 = por %p150, %p151
      %p153 = scmp.ne.s32.totalorder %s139, %s140
      %p154 = scmp.eq.s32.totalorder %s23, 3
      %p155 = por %p153, %p154
      %p157 = scmp.ne.s32.totalorder %s140, %s156
      %p158 = scmp.eq.s32.totalorder %s23, 0
      %p159 = por %p157, %p158
      %s160 = ssub.s32 %s24, %s43
      %s161 = ssub.s32 %s25, %s39
      %s162 = sor.u32 %s160, %s161
      %p163 = scmp.eq.s32.totalorder %s162, 0
      %s165 = sadd.s32 %s164, 1
      %s166 = scalar_select %p163, %s164, %s165
      %p169 = pneg %p163
      %p170 = scmp.eq.s32.totalorder %s17, 3
      %p171 = por %p169, %p170
      %p172 = scmp.ne.s32.totalorder %s164, %s167
      %p173 = scmp.eq.s32.totalorder %s17, 0
      %p174 = por %p172, %p173
      %p175 = scmp.ne.s32.totalorder %s164, %s167
      %p176 = scmp.eq.s32.totalorder %s22, 3
      %p177 = por %p175, %p176
      %p178 = scmp.ne.s32.totalorder %s167, %s168
      %p179 = scmp.eq.s32.totalorder %s22, 0
      %p180 = por %p178, %p179
      %p181 = scmp.ne.s32.totalorder %s167, %s168
      %p182 = scmp.eq.s32.totalorder %s23, 3
      %p183 = por %p181, %p182
      %p185 = scmp.ne.s32.totalorder %s168, %s184
      %p186 = scmp.eq.s32.totalorder %s23, 0
      %p187 = por %p185, %p186
      %p188 = scmp.le.s32.totalorder 1, %s17
      %p189 = scmp.lt.s32.totalorder %s17, 5
      %p190 = pnand %p188, %p189
      %p191 = pneg %p190
      // Predicated region
      $region9: #{weight_dice_loss_map.1} parent=5 // pred_check
        _
      $region10: #{weight_dice_loss_map.1} parent=5 // pred_check_branch
        %193 = sbr.rel (%p190) target = $region12
      $region11: #{weight_dice_loss_map.1} parent=5 // pred_region
        %s194 = ssub.s32 %s17, 1
      $region12: #{weight_dice_loss_map.1} parent=5 // pred_fallthru
        _
      %p195 = scmp.lt.s32.totalorder %s17, 4
      // Predicated region
      $region13: #{weight_dice_loss_map.1} parent=5 // pred_check
        %p196 = pneg %p195
      $region14: #{weight_dice_loss_map.1} parent=5 // pred_check_branch
        %198 = sbr.rel (%p196) target = $region16
      $region15: #{weight_dice_loss_map.1} parent=5 // pred_region
        // Predicated region
        $region17: #{weight_dice_loss_map.1} parent=15 // pred_check
          %p199 = pneg %p60
        $region18: #{weight_dice_loss_map.1} parent=15 // pred_check_branch
          %201 = sbr.rel (%p199) target = $region20
        $region19: #{weight_dice_loss_map.1} parent=15 // pred_region
          %s202 = sand.u32 %s50, 1
          %s203 = scalar_lea.sflag [#allocation3], %s202
          %s204 = sand.u32 %s50, 1
          %s205 = smul.addr %s204, 16
          %s206 = scalar_lea.vmem [#allocation2], %s205
          %s207 = smul.u32 2, %s26
          %s209 = ssub.s32 256, 256
          %210 = vsyncadd %s203, %s209
          %s211 = smul.addr %s25, 2
          %s212 = sadd.s32 %s207, %s211
          %s213 = smul.addr %s24, 4
          %s214 = sadd.s32 %s212, %s213
          %s215 = smul.addr %s214, 128
          %s216 = scalar_lea.hbm %s0, %s215
          %s217 = sshll.u32 %s206, 4
          %s218 = int_to_ptr.vmem [resolvable:$true] %s217
          %223 = dma.hbm_to_vmem [thread:$0]  %s216, 256, %s218, %s203, 128, 128, 8
        $region20: #{weight_dice_loss_map.1} parent=15 // pred_fallthru
          _
        // Predicated region
        $region21: #{weight_dice_loss_map.1} parent=15 // pred_check
          %p224 = pneg %p90
        $region22: #{weight_dice_loss_map.1} parent=15 // pred_check_branch
          %226 = sbr.rel (%p224) target = $region24
        $region23: #{weight_dice_loss_map.1} parent=15 // pred_region
          %s227 = sand.u32 %s80, 1
          %s228 = scalar_lea.sflag [#allocation5], %s227
          %s229 = sand.u32 %s80, 1
          %s230 = smul.addr %s229, 16
          %s231 = scalar_lea.vmem [#allocation4], %s230
          %s232 = smul.u32 2, %s26
          %s234 = ssub.s32 256, 256
          %235 = vsyncadd %s228, %s234
          %s236 = smul.addr %s25, 2
          %s237 = sadd.s32 %s232, %s236
          %s238 = smul.addr %s24, 4
          %s239 = sadd.s32 %s237, %s238
          %s240 = smul.addr %s239, 128
          %s241 = scalar_lea.hbm %s1, %s240
          %s242 = sshll.u32 %s231, 4
          %s243 = int_to_ptr.vmem [resolvable:$true] %s242
          %248 = dma.hbm_to_vmem [thread:$0]  %s241, 256, %s243, %s228, 128, 128, 8
        $region24: #{weight_dice_loss_map.1} parent=15 // pred_fallthru
          _
      $region16: #{weight_dice_loss_map.1} parent=5 // pred_fallthru
        _
      %p249 = scmp.le.s32.totalorder 1, %s17
      %p250 = scmp.lt.s32.totalorder %s17, 5
      %p251 = pnand %p249, %p250
      %p252 = pneg %p251
      // Predicated region
      $region25: #{weight_dice_loss_map.1} parent=5 // pred_check
        _
      $region26: #{weight_dice_loss_map.1} parent=5 // pred_check_branch
        %254 = sbr.rel (%p251) target = $region28
      $region27: #{weight_dice_loss_map.1} parent=5 // pred_region
        %s255 = ssub.s32 %s17, 1
        %s256 = sand.u32 %s53, 1
        %s257 = scalar_lea.sflag [#allocation3], %s256
        %s258 = sand.u32 %s53, 1
        %s259 = smul.addr %s258, 16
        %s260 = scalar_lea.vmem [#allocation2], %s259
        // Predicated region
        $region29: #{weight_dice_loss_map.1} parent=27 // pred_check
          %p261 = pneg %p66
        $region30: #{weight_dice_loss_map.1} parent=27 // pred_check_branch
          %263 = sbr.rel (%p261) target = $region32
        $region31: #{weight_dice_loss_map.1} parent=27 // pred_region
          %264 = dma.done %s257, 256
        $region32: #{weight_dice_loss_map.1} parent=27 // pred_fallthru
          _
        %s265 = sand.u32 %s83, 1
        %s266 = scalar_lea.sflag [#allocation5], %s265
        %s267 = sand.u32 %s83, 1
        %s268 = smul.addr %s267, 16
        %s269 = scalar_lea.vmem [#allocation4], %s268
        // Predicated region
        $region33: #{weight_dice_loss_map.1} parent=27 // pred_check
          %p270 = pneg %p96
        $region34: #{weight_dice_loss_map.1} parent=27 // pred_check_branch
          %272 = sbr.rel (%p270) target = $region36
        $region35: #{weight_dice_loss_map.1} parent=27 // pred_region
          %273 = dma.done %s266, 256
        $region36: #{weight_dice_loss_map.1} parent=27 // pred_fallthru
          _
        %s274 = sand.u32 %s53, 1
        %s275 = scalar_lea.sflag [#allocation3], %s274
        %s276 = sand.u32 %s53, 1
        %s277 = smul.addr %s276, 16
        %s278 = scalar_lea.vmem [#allocation2], %s277
        %p279 = pneg %p66
        %p280 = pneg %p63
        %s281 = sand.u32 %s83, 1
        %s282 = scalar_lea.sflag [#allocation5], %s281
        %s283 = sand.u32 %s83, 1
        %s284 = smul.addr %s283, 16
        %s285 = scalar_lea.vmem [#allocation4], %s284
        %p286 = pneg %p96
        %p287 = pneg %p93
        %p288 = pneg %p124
        %p289 = pneg %p121
        %p290 = scmp.lt.s32.totalorder %s27, 1
        %s291 = scalar_select %p290, %s27, 1
        %p292 = scmp.lt.s32.totalorder %s28, 1
        %s293 = scalar_select %p292, %s28, 1
        %s294 = smul.addr %s291, 2
        %s295 = sadd.s32 %s293, %s294
        %s296 = smul.addr %s295, 8
        %s297 = scalar_lea.vmem %s2, %s296
        %p298 = pneg %p152
        %p299 = pneg %p149
        %p300 = scmp.lt.s32.totalorder %s27, 1
        %s301 = scalar_select %p300, %s27, 1
        %p302 = scmp.lt.s32.totalorder %s28, 1
        %s303 = scalar_select %p302, %s28, 1
        %s304 = smul.addr %s301, 2
        %s305 = sadd.s32 %s303, %s304
        %s306 = smul.addr %s305, 8
        %s307 = scalar_lea.vmem %s3, %s306
        %p308 = pneg %p180
        %p309 = pneg %p177
        %p310 = scmp.lt.s32.totalorder %s27, 1
        %s311 = scalar_select %p310, %s27, 1
        %p312 = scmp.lt.s32.totalorder %s28, 1
        %s313 = scalar_select %p312, %s28, 1
        %s314 = smul.addr %s311, 2
        %s315 = sadd.s32 %s313, %s314
        %s316 = smul.addr %s315, 8
        %s317 = scalar_lea.vmem %s4, %s316
        %s318 = smul.u32 2, %s29
        %s319 = smul.u32 2, %s29
        %p320 = scmp.lt.s32.totalorder %s27, 1
        %s321 = scalar_select %p320, %s27, 1
        %p322 = scmp.lt.s32.totalorder %s28, 1
        %s323 = scalar_select %p322, %s28, 1
        %s324 = smul.addr %s321, 2
        %s325 = sadd.s32 %s323, %s324
        %s326 = smul.addr %s325, 8
        %s327 = scalar_lea.vmem %s2, %s326
        %p328 = scmp.lt.s32.totalorder %s27, 1
        %s329 = scalar_select %p328, %s27, 1
        %p330 = scmp.lt.s32.totalorder %s28, 1
        %s331 = scalar_select %p330, %s28, 1
        %s332 = smul.addr %s329, 2
        %s333 = sadd.s32 %s331, %s332
        %s334 = smul.addr %s333, 8
        %s335 = scalar_lea.vmem %s3, %s334
        %p336 = scmp.lt.s32.totalorder %s27, 1
        %s337 = scalar_select %p336, %s27, 1
        %p338 = scmp.lt.s32.totalorder %s28, 1
        %s339 = scalar_select %p338, %s28, 1
        %s340 = smul.addr %s337, 2
        %s341 = sadd.s32 %s339, %s340
        %s342 = smul.addr %s341, 8
        %s343 = scalar_lea.vmem %s4, %s342
        %p344 = scmp.eq.s32.totalorder %s29, 0
        // Predicated region
        $region37: #{weight_dice_loss_map.1} parent=27 // pred_check
          %p345 = pneg %p344
        $region38: #{weight_dice_loss_map.1} parent=27 // pred_check_branch
          %347 = sbr.rel (%p345) target = $region40
        $region39: #{weight_dice_loss_map.1} parent=27 // pred_region
          %vm348 = vcmask 130048
          %349 = vst.msk [vmem:[%s327] sm:$0xff] %vm348, 0.0
          %350 = vst.msk [vmem:[%s335] sm:$0xff] %vm348, 0.0
          %351 = vst.msk [vmem:[%s343] sm:$0xff] %vm348, 0.0
        $region40: #{weight_dice_loss_map.1} parent=27 // pred_fallthru
          _
        %v352 = vld [vmem:[%s260] sm:$0xff]
        %v353 = vld [vmem:[%s269] sm:$0xff]
        %v354 = vmul.f32 %v352, %v353
        %v355 = vadd.f32 %v354, 0.0
        %v356 = vadd.f32 %v352, 0.0
        %v357 = vadd.f32 %v353, 0.0
        %s358 = scalar_lea.vmem %s260, 8 [#allocation2]
        %v359 = vld [vmem:[%s358] sm:$0xff]
        %s360 = scalar_lea.vmem %s269, 8 [#allocation4]
        %v361 = vld [vmem:[%s360] sm:$0xff]
        %v362 = vmul.f32 %v359, %v361
        %v363 = vadd.f32 %v355, %v362
        %v364 = vadd.f32 %v356, %v359
        %v365 = vadd.f32 %v357, %v361
        %v366 = vld [vmem:[%s327] sm:$0xff]
        %v367 = vadd.f32 %v366, %v363
        %vm368 = vcmask 130048
        %369 = vst.msk [vmem:[%s327] sm:$0xff] %vm368, %v367
        %v370 = vld [vmem:[%s335] sm:$0xff]
        %v371 = vadd.f32 %v370, %v364
        %372 = vst.msk [vmem:[%s335] sm:$0xff] %vm368, %v371
        %v373 = vld [vmem:[%s343] sm:$0xff]
        %v374 = vadd.f32 %v373, %v365
        %375 = vst.msk [vmem:[%s343] sm:$0xff] %vm368, %v374
        %p376 = scmp.lt.s32.totalorder %s27, 1
        %s377 = scalar_select %p376, %s27, 1
        %p378 = scmp.lt.s32.totalorder %s28, 1
        %s379 = scalar_select %p378, %s28, 1
        %s380 = smul.addr %s377, 2
        %s381 = sadd.s32 %s379, %s380
        %s382 = smul.addr %s381, 8
        %s383 = scalar_lea.vmem %s2, %s382
        %p384 = scmp.lt.s32.totalorder %s27, 1
        %s385 = scalar_select %p384, %s27, 1
        %p386 = scmp.lt.s32.totalorder %s28, 1
        %s387 = scalar_select %p386, %s28, 1
        %s388 = smul.addr %s385, 2
        %s389 = sadd.s32 %s387, %s388
        %s390 = smul.addr %s389, 8
        %s391 = scalar_lea.vmem %s3, %s390
        %p392 = scmp.lt.s32.totalorder %s27, 1
        %s393 = scalar_select %p392, %s27, 1
        %p394 = scmp.lt.s32.totalorder %s28, 1
        %s395 = scalar_select %p394, %s28, 1
        %s396 = smul.addr %s393, 2
        %s397 = sadd.s32 %s395, %s396
        %s398 = smul.addr %s397, 8
        %s399 = scalar_lea.vmem %s4, %s398
        // Predicated region
        $region41: #{weight_dice_loss_map.1} parent=27 // pred_check
          %p400 = pneg %p121
        $region42: #{weight_dice_loss_map.1} parent=27 // pred_check_branch
          %402 = sbr.rel (%p400) target = $region44
        $region43: #{weight_dice_loss_map.1} parent=27 // pred_region
          _
        $region44: #{weight_dice_loss_map.1} parent=27 // pred_fallthru
          _
        // Predicated region
        $region45: #{weight_dice_loss_map.1} parent=27 // pred_check
          %p403 = pneg %p149
        $region46: #{weight_dice_loss_map.1} parent=27 // pred_check_branch
          %405 = sbr.rel (%p403) target = $region48
        $region47: #{weight_dice_loss_map.1} parent=27 // pred_region
          _
        $region48: #{weight_dice_loss_map.1} parent=27 // pred_fallthru
          _
        // Predicated region
        $region49: #{weight_dice_loss_map.1} parent=27 // pred_check
          %p406 = pneg %p177
        $region50: #{weight_dice_loss_map.1} parent=27 // pred_check_branch
          %408 = sbr.rel (%p406) target = $region52
        $region51: #{weight_dice_loss_map.1} parent=27 // pred_region
          _
        $region52: #{weight_dice_loss_map.1} parent=27 // pred_fallthru
          _
      $region28: #{weight_dice_loss_map.1} parent=5 // pred_fallthru
        _
      %p409 = scmp.le.s32.totalorder 2, %s17
      // Predicated region
      $region53: #{weight_dice_loss_map.1} parent=5 // pred_check
        %p410 = pneg %p409
      $region54: #{weight_dice_loss_map.1} parent=5 // pred_check_branch
        %412 = sbr.rel (%p410) target = $region56
      $region55: #{weight_dice_loss_map.1} parent=5 // pred_region
        %s413 = ssub.s32 %s17, 2
        // Predicated region
        $region57: #{weight_dice_loss_map.1} parent=55 // pred_check
          %p414 = pneg %p127
        $region58: #{weight_dice_loss_map.1} parent=55 // pred_check_branch
          %416 = sbr.rel (%p414) target = $region60
        $region59: #{weight_dice_loss_map.1} parent=55 // pred_region
          %p417 = scmp.lt.s32.totalorder %s30, 1
          %s418 = scalar_select %p417, %s30, 1
          %p419 = scmp.lt.s32.totalorder %s31, 1
          %s420 = scalar_select %p419, %s31, 1
          %s421 = smul.addr %s418, 2
          %s422 = sadd.s32 %s420, %s421
          %s423 = smul.addr %s422, 8
          %s424 = scalar_lea.vmem %s2, %s423
        $region60: #{weight_dice_loss_map.1} parent=55 // pred_fallthru
          _
        // Predicated region
        $region61: #{weight_dice_loss_map.1} parent=55 // pred_check
          %p425 = pneg %p155
        $region62: #{weight_dice_loss_map.1} parent=55 // pred_check_branch
          %427 = sbr.rel (%p425) target = $region64
        $region63: #{weight_dice_loss_map.1} parent=55 // pred_region
          %p428 = scmp.lt.s32.totalorder %s30, 1
          %s429 = scalar_select %p428, %s30, 1
          %p430 = scmp.lt.s32.totalorder %s31, 1
          %s431 = scalar_select %p430, %s31, 1
          %s432 = smul.addr %s429, 2
          %s433 = sadd.s32 %s431, %s432
          %s434 = smul.addr %s433, 8
          %s435 = scalar_lea.vmem %s3, %s434
        $region64: #{weight_dice_loss_map.1} parent=55 // pred_fallthru
          _
        // Predicated region
        $region65: #{weight_dice_loss_map.1} parent=55 // pred_check
          %p436 = pneg %p183
        $region66: #{weight_dice_loss_map.1} parent=55 // pred_check_branch
          %438 = sbr.rel (%p436) target = $region68
        $region67: #{weight_dice_loss_map.1} parent=55 // pred_region
          %p439 = scmp.lt.s32.totalorder %s30, 1
          %s440 = scalar_select %p439, %s30, 1
          %p441 = scmp.lt.s32.totalorder %s31, 1
          %s442 = scalar_select %p441, %s31, 1
          %s443 = smul.addr %s440, 2
          %s444 = sadd.s32 %s442, %s443
          %s445 = smul.addr %s444, 8
          %s446 = scalar_lea.vmem %s4, %s445
        $region68: #{weight_dice_loss_map.1} parent=55 // pred_fallthru
          _
      $region56: #{weight_dice_loss_map.1} parent=5 // pred_fallthru
        _
    $region6: #{weight_dice_loss_map.1} parent=1 // loop_footer
      %s21 = sadd.s32 1, %s17
    $region7: #{weight_dice_loss_map.1} parent=1 // loop_footer_branch
      %16 = sbr.rel target = $region3
    $region8: #{weight_dice_loss_map.1} parent=1 // loop_exit
      _
    %447 = vsyncpa [#allocation3], 1
    %s448 = scalar_lea.sflag [#allocation3], 1
    %449 = vsyncpa %s448, 1
    %450 = vsyncpa [#allocation5], 1
    %s451 = scalar_lea.sflag [#allocation5], 1
    %452 = vsyncpa %s451, 1

</llo_original>
